<compile_context>
chip_gen: v6e
topology: v6e:2x2x1
jax: 0.10.0
libtpu: 0.0.40
codegen_flags: <defaults>
</compile_context>

<pallas_src>
import jax
import jax.numpy as jnp
from jax.experimental import pallas as pl
from jax.experimental.pallas import tpu as pltpu

IN_F, H1, H2, OUT_F = 27, 87, 40, 4
PAD = 128            # lane width used for the hidden features
BN_EPS = 1e-5
MAX_TILE_B = 1024    # batch rows per grid step


# ----------------------------------------------------------------------------
# Kernel: fused (Linear [BN pre-folded] + ReLU) x 3.  Dropout == identity.
# ----------------------------------------------------------------------------
def _mlp_kernel(x_ref, w1_ref, w2_ref, w3_ref, c_ref, o_ref):
    c = c_ref[...]                                   # (3, PAD) packed biases
    wdt = w1_ref.dtype

    # layer 1: fc1 (+folded bn2) -> relu
    h = jnp.dot(x_ref[...].astype(wdt), w1_ref[...],
                preferred_element_type=jnp.float32)
    h = jnp.maximum(h + c[0:1, :], 0.0)

    # layer 2: fc3 (+folded bn3) -> relu
    h = jnp.dot(h.astype(wdt), w2_ref[...],
                preferred_element_type=jnp.float32)
    h = jnp.maximum(h + c[1:2, :], 0.0)

    # layer 3: fc4 (+folded bn4) -> relu ; output lanes = 4 (lane-slim store)
    h = jnp.dot(h.astype(wdt), w3_ref[...],
                preferred_element_type=jnp.float32)
    o_ref[...] = jnp.maximum(h + c[2:3, :OUT_F], 0.0).astype(o_ref.dtype)


# ----------------------------------------------------------------------------
# One-time parameter preparation (BN folding + padding).  Call ONCE, offline.
# ----------------------------------------------------------------------------
def prepare_params(params, param_dtype=jnp.float32):
    """Fold eval-mode BatchNorm into the Linear layers and pad to TPU tiles."""
    def fold(w, b, bn):
        gamma, beta, mean, var = bn
        scale = gamma / jnp.sqrt(var + BN_EPS)
        shift = beta - mean * scale
        return w * scale[None, :], b * scale + shift

    w1, c1 = fold(params["w1"], params["b1"], params["bn2"])   # (27,87), (87,)
    w2, c2 = fold(params["w2"], params["b2"], params["bn3"])   # (87,40), (40,)
    w3, c3 = fold(params["w3"], params["b3"], params["bn4"])   # (40, 4), (4,)

    def pad2(a, rows, cols):
        out = jnp.zeros((rows, cols), jnp.float32)
        return out.at[: a.shape[0], : a.shape[1]].set(a.astype(jnp.float32))

    # zero-padded rows/cols keep padded hidden lanes at exactly 0 through ReLU
    w1p = pad2(w1, IN_F, PAD)      # (27, 128)  — input contraction stays 27-deep
    w2p = pad2(w2, PAD, PAD)       # (128, 128)
    w3p = pad2(w3, PAD, OUT_F)     # (128, 4)   — output stays 4 lanes

    c = jnp.zeros((3, PAD), jnp.float32)
    c = c.at[0, :H1].set(c1.astype(jnp.float32))
    c = c.at[1, :H2].set(c2.astype(jnp.float32))
    c = c.at[2, :OUT_F].set(c3.astype(jnp.float32))

    return {
        "w1": w1p.astype(param_dtype),   # param_dtype=bfloat16 halves weight HBM
        "w2": w2p.astype(param_dtype),   # bytes (dots still accumulate in f32)
        "w3": w3p.astype(param_dtype),
        "c": c,                          # kept f32: added to f32 MXU accumulator
    }


# ----------------------------------------------------------------------------
# Forward: pad batch (if needed) -> one pallas_call -> slice.
# ----------------------------------------------------------------------------
@jax.jit
def classifier_forward(x, prepped):
    """x: (B, 27) -> (B, 4), matches PyTorch Classifier.forward in eval mode."""
    b = x.shape[0]
    x = x.reshape(b, -1).astype(jnp.float32)

    tile_b = min(MAX_TILE_B, max(8, ((b + 7) // 8) * 8))
    b_pad = ((b + tile_b - 1) // tile_b) * tile_b

    if b_pad != b:
        x_p = jnp.zeros((b_pad, IN_F), jnp.float32).at[:b, :].set(x)
    else:
        x_p = x

    const = lambda i: (0, 0)
    out = pl.pallas_call(
        _mlp_kernel,
        out_shape=jax.ShapeDtypeStruct((b_pad, OUT_F), jnp.float32),
        grid_spec=pltpu.PrefetchScalarGridSpec(
            num_scalar_prefetch=0,
            grid=(b_pad // tile_b,),
            in_specs=[
                pl.BlockSpec((tile_b, IN_F), lambda i: (i, 0)),   # activations
                pl.BlockSpec((IN_F, PAD), const),                 # w1 (resident)
                pl.BlockSpec((PAD, PAD), const),                  # w2 (resident)
                pl.BlockSpec((PAD, OUT_F), const),                # w3 (resident)
                pl.BlockSpec((3, PAD), const),                    # packed biases
            ],
            out_specs=pl.BlockSpec((tile_b, OUT_F), lambda i: (i, 0)),
        ),
        compiler_params=pltpu.CompilerParams(
            dimension_semantics=("parallel",)),
    )(x_p, prepped["w1"], prepped["w2"], prepped["w3"], prepped["c"])

    return out[:b]


# ----------------------------------------------------------------------------
# Deterministic params matching PyTorch Linear / BatchNorm1d defaults.
# ----------------------------------------------------------------------------
def init_params(key):
    ks = jax.random.split(key, 6)

    def linear(kw, kb, fan_in, fan_out):
        bound = 1.0 / jnp.sqrt(float(fan_in))
        w = jax.random.uniform(kw, (fan_in, fan_out), jnp.float32, -bound, bound)
        b = jax.random.uniform(kb, (fan_out,), jnp.float32, -bound, bound)
        return w, b

    w1, b1 = linear(ks[0], ks[1], IN_F, H1)
    w2, b2 = linear(ks[2], ks[3], H1, H2)
    w3, b3 = linear(ks[4], ks[5], H2, OUT_F)

    def bn(n):  # gamma, beta, running_mean, running_var (PyTorch defaults)
        return (jnp.ones((n,), jnp.float32), jnp.zeros((n,), jnp.float32),
                jnp.zeros((n,), jnp.float32), jnp.ones((n,), jnp.float32))

    return {"w1": w1, "b1": b1, "bn2": bn(H1),
            "w2": w2, "b2": b2, "bn3": bn(H2),
            "w3": w3, "b3": b3, "bn4": bn(OUT_F)}


def _reference_forward(x, params):
    """Pure-JAX reference of the PyTorch forward (eval mode)."""
    def bn(h, p):
        gamma, beta, mean, var = p
        return (h - mean) / jnp.sqrt(var + BN_EPS) * gamma + beta

    h = x.reshape(x.shape[0], -1)
    h = jnp.maximum(bn(h @ params["w1"] + params["b1"], params["bn2"]), 0.0)
    h = jnp.maximum(bn(h @ params["w2"] + params["b2"], params["bn3"]), 0.0)
    h = jnp.maximum(bn(h @ params["w3"] + params["b3"], params["bn4"]), 0.0)
    return h


if __name__ == "__main__":
    key = jax.random.PRNGKey(0)
    k_param, k_x1, k_x2 = jax.random.split(key, 3)

    params = init_params(k_param)
    prepped = prepare_params(params)          # one-time, offline prep

    # MinMax-scaled features live in [0, 1]
    x = jax.random.uniform(k_x1, (8, IN_F), jnp.float32)
    out = classifier_forward(x, prepped)
    jax.block_until_ready(out)
    ref = _reference_forward(x, params)
    assert out.shape == (8, OUT_F)
    assert jnp.allclose(out, ref, atol=1e-4, rtol=1e-4), "mismatch vs reference"

    # non-multiple-of-8 batch exercises the pad/mask path
    x2 = jax.random.uniform(k_x2, (5, IN_F), jnp.float32)
    out2 = classifier_forward(x2, prepped)
    jax.block_until_ready(out2)
    ref2 = _reference_forward(x2, params)
    assert out2.shape == (5, OUT_F)
    assert jnp.allclose(out2, ref2, atol=1e-4, rtol=1e-4), "mismatch vs reference (b=5)"

    print("KERNEL_OK")
</pallas_src>

<mosaic_0001>
module attributes {stable_mosaic.version = 11 : i64} {
  func.func @_mlp_kernel(%arg0: i32, %arg1: memref<8x27xf32, #tpu.memory_space<vmem>>, %arg2: memref<27x128xf32, #tpu.memory_space<vmem>>, %arg3: memref<128x128xf32, #tpu.memory_space<vmem>>, %arg4: memref<128x4xf32, #tpu.memory_space<vmem>>, %arg5: memref<3x128xf32, #tpu.memory_space<vmem>>, %arg6: memref<8x4xf32, #tpu.memory_space<vmem>>) attributes {dimension_semantics = [#tpu.dimension_semantics<parallel>], iteration_bounds = array<i64: 1>, scalar_prefetch = 0 : i64, scratch_operands = 0 : i64, tpu.core_type = #tpu.core_type<tc>, window_params = [{transform_indices = @transform_0, window_bounds = array<i64: 8, 27>}, {pipeline_mode = #tpu.pipeline_mode<synchronous>, transform_indices = @transform_1, window_bounds = array<i64: 27, 128>}, {pipeline_mode = #tpu.pipeline_mode<synchronous>, transform_indices = @transform_2, window_bounds = array<i64: 128, 128>}, {pipeline_mode = #tpu.pipeline_mode<synchronous>, transform_indices = @transform_3, window_bounds = array<i64: 128, 4>}, {pipeline_mode = #tpu.pipeline_mode<synchronous>, transform_indices = @transform_4, window_bounds = array<i64: 3, 128>}, {transform_indices = @transform_5, window_bounds = array<i64: 8, 4>}]} {
    %c0 = arith.constant 0 : index
    %c0_0 = arith.constant 0 : index
    %0 = vector.load %arg5[%c0, %c0_0] : memref<3x128xf32, #tpu.memory_space<vmem>>, vector<3x128xf32>
    %c0_1 = arith.constant 0 : index
    %c0_2 = arith.constant 0 : index
    %1 = vector.load %arg1[%c0_1, %c0_2] : memref<8x27xf32, #tpu.memory_space<vmem>>, vector<8x27xf32>
    %c0_3 = arith.constant 0 : index
    %c0_4 = arith.constant 0 : index
    %2 = vector.load %arg2[%c0_3, %c0_4] : memref<27x128xf32, #tpu.memory_space<vmem>>, vector<27x128xf32>
    %cst = arith.constant dense<0.000000e+00> : vector<8x128xf32>
    %3 = tpu.matmul %1, %2, %cst {dimension_numbers = #tpu.dot_dimension_numbers<[1], [0], [0], [1], [0, 0, 1, 1], [], []>} : vector<8x27xf32>, vector<27x128xf32>, vector<8x128xf32> -> vector<8x128xf32>
    %4 = vector.extract_strided_slice %0 {offsets = [0, 0], sizes = [1, 128], strides = [1, 1]} : vector<3x128xf32> to vector<1x128xf32>
    %5 = vector.broadcast %4 : vector<1x128xf32> to vector<8x128xf32>
    %6 = arith.addf %3, %5 : vector<8x128xf32>
    %cst_5 = arith.constant 0.000000e+00 : f32
    %7 = vector.broadcast %cst_5 : f32 to vector<8x128xf32>
    %8 = arith.maximumf %6, %7 : vector<8x128xf32>
    %c0_6 = arith.constant 0 : index
    %c0_7 = arith.constant 0 : index
    %9 = vector.load %arg3[%c0_6, %c0_7] : memref<128x128xf32, #tpu.memory_space<vmem>>, vector<128x128xf32>
    %cst_8 = arith.constant dense<0.000000e+00> : vector<8x128xf32>
    %10 = tpu.matmul %8, %9, %cst_8 {dimension_numbers = #tpu.dot_dimension_numbers<[1], [0], [0], [1], [0, 0, 1, 1], [], []>} : vector<8x128xf32>, vector<128x128xf32>, vector<8x128xf32> -> vector<8x128xf32>
    %11 = vector.extract_strided_slice %0 {offsets = [1, 0], sizes = [1, 128], strides = [1, 1]} : vector<3x128xf32> to vector<1x128xf32>
    %12 = vector.broadcast %11 : vector<1x128xf32> to vector<8x128xf32>
    %13 = arith.addf %10, %12 : vector<8x128xf32>
    %cst_9 = arith.constant 0.000000e+00 : f32
    %14 = vector.broadcast %cst_9 : f32 to vector<8x128xf32>
    %15 = arith.maximumf %13, %14 : vector<8x128xf32>
    %c0_10 = arith.constant 0 : index
    %c0_11 = arith.constant 0 : index
    %16 = vector.load %arg4[%c0_10, %c0_11] : memref<128x4xf32, #tpu.memory_space<vmem>>, vector<128x4xf32>
    %cst_12 = arith.constant dense<0.000000e+00> : vector<8x4xf32>
    %17 = tpu.matmul %15, %16, %cst_12 {dimension_numbers = #tpu.dot_dimension_numbers<[1], [0], [0], [1], [0, 0, 1, 1], [], []>} : vector<8x128xf32>, vector<128x4xf32>, vector<8x4xf32> -> vector<8x4xf32>
    %18 = vector.extract_strided_slice %0 {offsets = [2, 0], sizes = [1, 4], strides = [1, 1]} : vector<3x128xf32> to vector<1x4xf32>
    %19 = vector.broadcast %18 : vector<1x4xf32> to vector<8x4xf32>
    %20 = arith.addf %17, %19 : vector<8x4xf32>
    %cst_13 = arith.constant 0.000000e+00 : f32
    %21 = vector.broadcast %cst_13 : f32 to vector<8x4xf32>
    %22 = arith.maximumf %20, %21 : vector<8x4xf32>
    %c0_14 = arith.constant 0 : index
    %c0_15 = arith.constant 0 : index
    %23 = vector.load %arg6[%c0_14, %c0_15] : memref<8x4xf32, #tpu.memory_space<vmem>>, vector<8x4xf32>
    tpu.vector_store %arg6[%c0_14, %c0_15], %22 {strides = array<i32>} : memref<8x4xf32, #tpu.memory_space<vmem>>, vector<8x4xf32>,
    return
  }
  func.func @transform_0(%arg0: i32) -> (i32, i32) {
    %c0_i32 = arith.constant 0 : i32
    %c0_i32_0 = arith.constant 0 : i32
    return %arg0, %c0_i32 : i32, i32
  }
  func.func @transform_1(%arg0: i32) -> (i32, i32) {
    %c0_i32 = arith.constant 0 : i32
    %c0_i32_0 = arith.constant 0 : i32
    %c0_i32_1 = arith.constant 0 : i32
    return %c0_i32, %c0_i32_0 : i32, i32
  }
  func.func @transform_2(%arg0: i32) -> (i32, i32) {
    %c0_i32 = arith.constant 0 : i32
    %c0_i32_0 = arith.constant 0 : i32
    %c0_i32_1 = arith.constant 0 : i32
    return %c0_i32, %c0_i32_0 : i32, i32
  }
  func.func @transform_3(%arg0: i32) -> (i32, i32) {
    %c0_i32 = arith.constant 0 : i32
    %c0_i32_0 = arith.constant 0 : i32
    %c0_i32_1 = arith.constant 0 : i32
    return %c0_i32, %c0_i32_0 : i32, i32
  }
  func.func @transform_4(%arg0: i32) -> (i32, i32) {
    %c0_i32 = arith.constant 0 : i32
    %c0_i32_0 = arith.constant 0 : i32
    %c0_i32_1 = arith.constant 0 : i32
    return %c0_i32, %c0_i32_0 : i32, i32
  }
  func.func @transform_5(%arg0: i32) -> (i32, i32) {
    %c0_i32 = arith.constant 0 : i32
    %c0_i32_0 = arith.constant 0 : i32
    return %arg0, %c0_i32 : i32, i32
  }
}

</mosaic_0001>

<llo_original>
// kernel: classifier_forward.1
$region0: #{classifier_forward.1}
  #allocation0 [shape = 'u32[]', space=smem, size = 0x4, offset = 0x4, fixed_abs, tag = 'smem constant byte address 0x4 - core index']
  #allocation1 [shape = 'u32[144,128]{1,0:T(1,128)}', space=vmem, size = 0x12000, scoped, tag = 'internal scratch']
  %s0 = inlined_call_operand.vmem [shape: f32[8,27], index: 0, kind: input, shape index: {}]
  %s1 = inlined_call_operand.hbm [shape: f32[27,128], index: 1, kind: input, shape index: {}]
  %s2 = inlined_call_operand.vmem [shape: f32[128,128], index: 2, kind: input, shape index: {}]
  %s3 = inlined_call_operand.vmem [shape: f32[128,4], index: 3, kind: input, shape index: {}]
  %s4 = inlined_call_operand.hbm [shape: f32[3,128], index: 4, kind: input, shape index: {}]
  %s5 = inlined_call_operand.vmem [shape: f32[8,4], index: 5, kind: output, shape index: {}]
  %s6 = sld [smem:[#allocation0]]
  $region38: #{classifier_forward.1} parent=0
    _
  %s8 = ssub.s32 1, %s6
  %s9 = scalar_select 0, %s8, %s6
  $region1: #{classifier_forward.1} parent=0
    #allocation2 [shape = 'u8[16384]{0}', space=vmem, size = 0x4000, scoped, tag = 'input window, operand 1, single buffered']
    #allocation3 [shape = 's32[1]{0}', space=sflag, size = 0x4, scoped, tag = 'scoped memory for classifier_forward.1']
    #allocation4 [shape = 'u8[2048]{0}', space=vmem, size = 0x800, scoped, tag = 'input window, operand 4, single buffered']
    #allocation5 [shape = 's32[1]{0}', space=sflag, size = 0x4, scoped, tag = 'scoped memory for classifier_forward.1']
    %10 = vsyncpa [#allocation3], 0
    %11 = vsyncpa [#allocation5], 0
    // Predicated region
    $region2: #{classifier_forward.1} parent=1 // pred_check
      _
    $region3: #{classifier_forward.1} parent=1 // pred_check_branch
      %13 = sbr.rel (0) target = $region5
    $region4: #{classifier_forward.1} parent=1 // pred_region
      _
    $region5: #{classifier_forward.1} parent=1 // pred_fallthru
      _
    // Predicated region
    $region6: #{classifier_forward.1} parent=1 // pred_check
      _
    $region7: #{classifier_forward.1} parent=1 // pred_check_branch
      %15 = sbr.rel (0) target = $region9
    $region8: #{classifier_forward.1} parent=1 // pred_region
      %s17 = ssub.s32 512, 512
      %18 = vsyncadd [#allocation3], %s17
      %s19 = sshll.u32 [#allocation2], 4
      %s20 = int_to_ptr.vmem [resolvable:$true] %s19
      %25 = dma.hbm_to_vmem [thread:$0]  %s1, 512, %s20, [#allocation3], 128, 128, 8
    $region9: #{classifier_forward.1} parent=1 // pred_fallthru
      _
    // Predicated region
    $region10: #{classifier_forward.1} parent=1 // pred_check
      _
    $region11: #{classifier_forward.1} parent=1 // pred_check_branch
      %27 = sbr.rel (0) target = $region13
    $region12: #{classifier_forward.1} parent=1 // pred_region
      _
    $region13: #{classifier_forward.1} parent=1 // pred_fallthru
      _
    // Predicated region
    $region14: #{classifier_forward.1} parent=1 // pred_check
      _
    $region15: #{classifier_forward.1} parent=1 // pred_check_branch
      %29 = sbr.rel (0) target = $region17
    $region16: #{classifier_forward.1} parent=1 // pred_region
      _
    $region17: #{classifier_forward.1} parent=1 // pred_fallthru
      _
    // Predicated region
    $region18: #{classifier_forward.1} parent=1 // pred_check
      _
    $region19: #{classifier_forward.1} parent=1 // pred_check_branch
      %31 = sbr.rel (0) target = $region21
    $region20: #{classifier_forward.1} parent=1 // pred_region
      %s33 = ssub.s32 64, 64
      %34 = vsyncadd [#allocation5], %s33
      %s36 = sshll.u32 [#allocation4], 4
      %s37 = int_to_ptr.vmem [resolvable:$true] %s36
      %39 = dma.hbm_to_vmem [thread:$0]  %s4, 64, %s37, [#allocation5]
    $region21: #{classifier_forward.1} parent=1 // pred_fallthru
      _
    // Predicated region
    $region22: #{classifier_forward.1} parent=1 // pred_check
      _
    $region23: #{classifier_forward.1} parent=1 // pred_check_branch
      %41 = sbr.rel (0) target = $region25
    $region24: #{classifier_forward.1} parent=1 // pred_region
      %42 = dma.done [#allocation3], 512
    $region25: #{classifier_forward.1} parent=1 // pred_fallthru
      _
    // Predicated region
    $region26: #{classifier_forward.1} parent=1 // pred_check
      _
    $region27: #{classifier_forward.1} parent=1 // pred_check_branch
      %44 = sbr.rel (0) target = $region29
    $region28: #{classifier_forward.1} parent=1 // pred_region
      %45 = dma.done [#allocation5], 64
    $region29: #{classifier_forward.1} parent=1 // pred_fallthru
      _
    %v46 = vld [vmem:[#allocation4] sm:$0x7]
    %v47 = vld [vmem:[%s0] sm:$0xff]
    %v48 = vld [vmem:[#allocation2] sm:$0xff]
    %v49 = vld [vmem:[#allocation2 + $0x8] sm:$0xff]
    %v50 = vld [vmem:[#allocation2 + $0x10] sm:$0xff]
    %v51 = vld [vmem:[#allocation2 + $0x18] sm:$0x7]
    %v52 = vlaneseq
    %v53 = vshrl.u32 %v52, 7
    %v54 = vsub.s32 0, %v53
    %v55 = vrot.slane %v46, %v54
    %vm56 = vcmask 220160
    %v58 = vsel %vm56, %v47, 0
    %vm60 = vcmask 1042432
    %v62 = vsel %vm60, %v51, 0
    %64 = vmatprep.subr.mxu0 0.0
    %65 = vmatpush1.msra.mxu0 0.0
    %66 = vmatprep.subr.mxu0 0.0
    %67 = vmatpush1.msra.mxu0 0.0
    %68 = vmatprep.subr.mxu0 0.0
    %69 = vmatpush1.msra.mxu0 0.0
    %70 = vmatprep.subr.mxu0 0.0
    %71 = vmatpush1.msra.mxu0 0.0
    %72 = vmatprep.subr.mxu0 0.0
    %73 = vmatpush1.msra.mxu0 0.0
    %74 = vmatprep.subr.mxu0 0.0
    %75 = vmatpush1.msra.mxu0 0.0
    %76 = vmatprep.subr.mxu0 0.0
    %77 = vmatpush1.msra.mxu0 0.0
    %78 = vmatprep.subr.mxu0 0.0
    %79 = vmatpush1.msra.mxu0 0.0
    %80 = vmatprep.subr.mxu0 0.0
    %81 = vmatpush1.msra.mxu0 0.0
    %82 = vmatprep.subr.mxu0 0.0
    %83 = vmatpush1.msra.mxu0 0.0
    %84 = vmatprep.subr.mxu0 0.0
    %85 = vmatpush1.msra.mxu0 0.0
    %86 = vmatprep.subr.mxu0 0.0
    %87 = vmatpush1.msra.mxu0 0.0
    %88 = vmatprep.subr.mxu0 0.0
    %89 = vmatpush1.msra.mxu0 %v62
    %90 = vmatprep.subr.mxu0 0.0
    %91 = vmatpush1.msra.mxu0 %v50
    %92 = vmatprep.subr.mxu0 0.0
    %93 = vmatpush1.msra.mxu0 %v49
    %94 = vmatprep.subr.mxu0 0.0
    %95 = vmatpush1.msra.mxu0 %v48
    %96 = vmatprep.subr.mxu0 0.0
    %97 = vmatpush2.msra.mxu0 0.0
    %98 = vmatprep.subr.mxu0 0.0
    %99 = vmatpush2.msra.mxu0 0.0
    %100 = vmatprep.subr.mxu0 0.0
    %101 = vmatpush2.msra.mxu0 0.0
    %102 = vmatprep.subr.mxu0 0.0
    %103 = vmatpush2.msra.mxu0 0.0
    %104 = vmatprep.subr.mxu0 0.0
    %105 = vmatpush2.msra.mxu0 0.0
    %106 = vmatprep.subr.mxu0 0.0
    %107 = vmatpush2.msra.mxu0 0.0
    %108 = vmatprep.subr.mxu0 0.0
    %109 = vmatpush2.msra.mxu0 0.0
    %110 = vmatprep.subr.mxu0 0.0
    %111 = vmatpush2.msra.mxu0 0.0
    %112 = vmatprep.subr.mxu0 0.0
    %113 = vmatpush2.msra.mxu0 0.0
    %114 = vmatprep.subr.mxu0 0.0
    %115 = vmatpush2.msra.mxu0 0.0
    %116 = vmatprep.subr.mxu0 0.0
    %117 = vmatpush2.msra.mxu0 0.0
    %118 = vmatprep.subr.mxu0 0.0
    %119 = vmatpush2.msra.mxu0 0.0
    %120 = vmatprep.subr.mxu0 0.0
    %121 = vmatpush2.msra.mxu0 0.0
    %122 = vmatprep.subr.mxu0 0.0
    %123 = vmatpush2.msra.mxu0 0.0
    %124 = vmatprep.subr.mxu0 0.0
    %125 = vmatpush2.msra.mxu0 0.0
    %126 = vmatprep.subr.mxu0 0.0
    %127 = vmatpush2.msra.mxu0 0.0
    %128 = vmatprep.mubr.f32.mxu0 0.0
    %129 = vmatmul.mubr.f32.gmra.mxu0 %v58
    %v130 = vpop.f32.mrf.mxu0
    %v131 = vadd.f32 %v55, %v130
    %v132 = vpop.f32.mrf.mxu0
    %133 = vdwg.mxu0
    %v134 = vmax.f32 %v131, 0.0
    %v135 = vld [vmem:[%s2] sm:$0xff]
    %v136 = vld [vmem:[%s2 + $0x8] sm:$0xff]
    %v137 = vld [vmem:[%s2 + $0x10] sm:$0xff]
    %v138 = vld [vmem:[%s2 + $0x18] sm:$0xff]
    %v139 = vld [vmem:[%s2 + $0x20] sm:$0xff]
    %v140 = vld [vmem:[%s2 + $0x28] sm:$0xff]
    %v141 = vld [vmem:[%s2 + $0x30] sm:$0xff]
    %v142 = vld [vmem:[%s2 + $0x38] sm:$0xff]
    %v143 = vld [vmem:[%s2 + $0x40] sm:$0xff]
    %v144 = vld [vmem:[%s2 + $0x48] sm:$0xff]
    %v145 = vld [vmem:[%s2 + $0x50] sm:$0xff]
    %v146 = vld [vmem:[%s2 + $0x58] sm:$0xff]
    %v147 = vld [vmem:[%s2 + $0x60] sm:$0xff]
    %v148 = vld [vmem:[%s2 + $0x68] sm:$0xff]
    %v149 = vld [vmem:[%s2 + $0x70] sm:$0xff]
    %v150 = vld [vmem:[%s2 + $0x78] sm:$0xff]
    %v151 = vlaneseq
    %v152 = vshrl.u32 %v151, 7
    %v153 = vsub.s32 1, %v152
    %v154 = vrot.slane %v46, %v153
    %155 = vmatprep.subr.mxu0 0.0
    %156 = vmatpush1.msra.mxu0 %v150
    %157 = vmatprep.subr.mxu0 0.0
    %158 = vmatpush1.msra.mxu0 %v149
    %159 = vmatprep.subr.mxu0 0.0
    %160 = vmatpush1.msra.mxu0 %v148
    %161 = vmatprep.subr.mxu0 0.0
    %162 = vmatpush1.msra.mxu0 %v147
    %163 = vmatprep.subr.mxu0 0.0
    %164 = vmatpush1.msra.mxu0 %v146
    %165 = vmatprep.subr.mxu0 0.0
    %166 = vmatpush1.msra.mxu0 %v145
    %167 = vmatprep.subr.mxu0 0.0
    %168 = vmatpush1.msra.mxu0 %v144
    %169 = vmatprep.subr.mxu0 0.0
    %170 = vmatpush1.msra.mxu0 %v143
    %171 = vmatprep.subr.mxu0 0.0
    %172 = vmatpush1.msra.mxu0 %v142
    %173 = vmatprep.subr.mxu0 0.0
    %174 = vmatpush1.msra.mxu0 %v141
    %175 = vmatprep.subr.mxu0 0.0
    %176 = vmatpush1.msra.mxu0 %v140
    %177 = vmatprep.subr.mxu0 0.0
    %178 = vmatpush1.msra.mxu0 %v139
    %179 = vmatprep.subr.mxu0 0.0
    %180 = vmatpush1.msra.mxu0 %v138
    %181 = vmatprep.subr.mxu0 0.0
    %182 = vmatpush1.msra.mxu0 %v137
    %183 = vmatprep.subr.mxu0 0.0
    %184 = vmatpush1.msra.mxu0 %v136
    %185 = vmatprep.subr.mxu0 0.0
    %186 = vmatpush1.msra.mxu0 %v135
    %187 = vmatprep.subr.mxu0 0.0
    %188 = vmatpush2.msra.mxu0 0.0
    %189 = vmatprep.subr.mxu0 0.0
    %190 = vmatpush2.msra.mxu0 0.0
    %191 = vmatprep.subr.mxu0 0.0
    %192 = vmatpush2.msra.mxu0 0.0
    %193 = vmatprep.subr.mxu0 0.0
    %194 = vmatpush2.msra.mxu0 0.0
    %195 = vmatprep.subr.mxu0 0.0
    %196 = vmatpush2.msra.mxu0 0.0
    %197 = vmatprep.subr.mxu0 0.0
    %198 = vmatpush2.msra.mxu0 0.0
    %199 = vmatprep.subr.mxu0 0.0
    %200 = vmatpush2.msra.mxu0 0.0
    %201 = vmatprep.subr.mxu0 0.0
    %202 = vmatpush2.msra.mxu0 0.0
    %203 = vmatprep.subr.mxu0 0.0
    %204 = vmatpush2.msra.mxu0 0.0
    %205 = vmatprep.subr.mxu0 0.0
    %206 = vmatpush2.msra.mxu0 0.0
    %207 = vmatprep.subr.mxu0 0.0
    %208 = vmatpush2.msra.mxu0 0.0
    %209 = vmatprep.subr.mxu0 0.0
    %210 = vmatpush2.msra.mxu0 0.0
    %211 = vmatprep.subr.mxu0 0.0
    %212 = vmatpush2.msra.mxu0 0.0
    %213 = vmatprep.subr.mxu0 0.0
    %214 = vmatpush2.msra.mxu0 0.0
    %215 = vmatprep.subr.mxu0 0.0
    %216 = vmatpush2.msra.mxu0 0.0
    %217 = vmatprep.subr.mxu0 0.0
    %218 = vmatpush2.msra.mxu0 0.0
    %219 = vmatprep.mubr.f32.mxu0 0.0
    %220 = vmatmul.mubr.f32.gmra.mxu0 %v134
    %v221 = vpop.f32.mrf.mxu0
    %v222 = vadd.f32 %v154, %v221
    %v223 = vpop.f32.mrf.mxu0
    %224 = vdwg.mxu0
    %v225 = vmax.f32 %v222, 0.0
    %v226 = vld [vmem:[%s3] sm:$0xff]
    %v227 = vld [vmem:[%s3 + $0x8] sm:$0xff]
    %v228 = vld [vmem:[%s3 + $0x10] sm:$0xff]
    %v229 = vld [vmem:[%s3 + $0x18] sm:$0xff]
    %v230 = vld [vmem:[%s3 + $0x20] sm:$0xff]
    %v231 = vld [vmem:[%s3 + $0x28] sm:$0xff]
    %v232 = vld [vmem:[%s3 + $0x30] sm:$0xff]
    %v233 = vld [vmem:[%s3 + $0x38] sm:$0xff]
    %v234 = vld [vmem:[%s3 + $0x40] sm:$0xff]
    %v235 = vld [vmem:[%s3 + $0x48] sm:$0xff]
    %v236 = vld [vmem:[%s3 + $0x50] sm:$0xff]
    %v237 = vld [vmem:[%s3 + $0x58] sm:$0xff]
    %v238 = vld [vmem:[%s3 + $0x60] sm:$0xff]
    %v239 = vld [vmem:[%s3 + $0x68] sm:$0xff]
    %v240 = vld [vmem:[%s3 + $0x70] sm:$0xff]
    %v241 = vld [vmem:[%s3 + $0x78] sm:$0xff]
    %v242 = vlaneseq
    %v243 = vshrl.u32 %v242, 7
    %v244 = vsub.s32 2, %v243
    %v245 = vrot.slane %v46, %v244
    %246 = vmatprep.subr.mxu0 0.0
    %247 = vmatpush1.msra.mxu0 %v241
    %248 = vmatprep.subr.mxu0 0.0
    %249 = vmatpush1.msra.mxu0 %v240
    %250 = vmatprep.subr.mxu0 0.0
    %251 = vmatpush1.msra.mxu0 %v239
    %252 = vmatprep.subr.mxu0 0.0
    %253 = vmatpush1.msra.mxu0 %v238
    %254 = vmatprep.subr.mxu0 0.0
    %255 = vmatpush1.msra.mxu0 %v237
    %256 = vmatprep.subr.mxu0 0.0
    %257 = vmatpush1.msra.mxu0 %v236
    %258 = vmatprep.subr.mxu0 0.0
    %259 = vmatpush1.msra.mxu0 %v235
    %260 = vmatprep.subr.mxu0 0.0
    %261 = vmatpush1.msra.mxu0 %v234
    %262 = vmatprep.subr.mxu0 0.0
    %263 = vmatpush1.msra.mxu0 %v233
    %264 = vmatprep.subr.mxu0 0.0
    %265 = vmatpush1.msra.mxu0 %v232
    %266 = vmatprep.subr.mxu0 0.0
    %267 = vmatpush1.msra.mxu0 %v231
    %268 = vmatprep.subr.mxu0 0.0
    %269 = vmatpush1.msra.mxu0 %v230
    %270 = vmatprep.subr.mxu0 0.0
    %271 = vmatpush1.msra.mxu0 %v229
    %272 = vmatprep.subr.mxu0 0.0
    %273 = vmatpush1.msra.mxu0 %v228
    %274 = vmatprep.subr.mxu0 0.0
    %275 = vmatpush1.msra.mxu0 %v227
    %276 = vmatprep.subr.mxu0 0.0
    %277 = vmatpush1.msra.mxu0 %v226
    %278 = vmatprep.subr.mxu0 0.0
    %279 = vmatpush2.msra.mxu0 0.0
    %280 = vmatprep.subr.mxu0 0.0
    %281 = vmatpush2.msra.mxu0 0.0
    %282 = vmatprep.subr.mxu0 0.0
    %283 = vmatpush2.msra.mxu0 0.0
    %284 = vmatprep.subr.mxu0 0.0
    %285 = vmatpush2.msra.mxu0 0.0
    %286 = vmatprep.subr.mxu0 0.0
    %287 = vmatpush2.msra.mxu0 0.0
    %288 = vmatprep.subr.mxu0 0.0
    %289 = vmatpush2.msra.mxu0 0.0
    %290 = vmatprep.subr.mxu0 0.0
    %291 = vmatpush2.msra.mxu0 0.0
    %292 = vmatprep.subr.mxu0 0.0
    %293 = vmatpush2.msra.mxu0 0.0
    %294 = vmatprep.subr.mxu0 0.0
    %295 = vmatpush2.msra.mxu0 0.0
    %296 = vmatprep.subr.mxu0 0.0
    %297 = vmatpush2.msra.mxu0 0.0
    %298 = vmatprep.subr.mxu0 0.0
    %299 = vmatpush2.msra.mxu0 0.0
    %300 = vmatprep.subr.mxu0 0.0
    %301 = vmatpush2.msra.mxu0 0.0
    %302 = vmatprep.subr.mxu0 0.0
    %303 = vmatpush2.msra.mxu0 0.0
    %304 = vmatprep.subr.mxu0 0.0
    %305 = vmatpush2.msra.mxu0 0.0
    %306 = vmatprep.subr.mxu0 0.0
    %307 = vmatpush2.msra.mxu0 0.0
    %308 = vmatprep.subr.mxu0 0.0
    %309 = vmatpush2.msra.mxu0 0.0
    %310 = vmatprep.mubr.f32.mxu0 0.0
    %311 = vmatmul.mubr.f32.gmra.mxu0 %v225
    %v312 = vpop.f32.mrf.mxu0
    %v313 = vadd.f32 %v245, %v312
    %v314 = vpop.f32.mrf.mxu0
    %315 = vdwg.mxu0
    %v316 = vmax.f32 %v313, 0.0
    %vm317 = vcmask 31744
    %318 = vst.msk [vmem:[%s5] sm:$0xff] %vm317, %v316
    // Predicated region
    $region30: #{classifier_forward.1} parent=1 // pred_check
      _
    $region31: #{classifier_forward.1} parent=1 // pred_check_branch
      %320 = sbr.rel (0) target = $region33
    $region32: #{classifier_forward.1} parent=1 // pred_region
      _
    $region33: #{classifier_forward.1} parent=1 // pred_fallthru
      _
    // Predicated region
    $region34: #{classifier_forward.1} parent=1 // pred_check
      _
    $region35: #{classifier_forward.1} parent=1 // pred_check_branch
      %322 = sbr.rel (0) target = $region37
    $region36: #{classifier_forward.1} parent=1 // pred_region
      _
    $region37: #{classifier_forward.1} parent=1 // pred_fallthru
      _
    %323 = vsyncpa [#allocation3], 1
    %324 = vsyncpa [#allocation5], 1

</llo_original>
